<compile_context>
chip_gen: v7x
topology: tpu7x:2x2x1
jax: 0.10.0
libtpu: 0.0.40
codegen_flags: <defaults>
</compile_context>

<pallas_src>
import functools

import jax
import jax.numpy as jnp
from jax.experimental import pallas as pl
from jax.experimental.pallas import tpu as pltpu


def _round_up(x, m):
    return -(-x // m) * m


def _sublane(dtype):
    # Sublane packing: 8 rows for 32-bit, 16 for 16-bit, 32 for 8-bit dtypes.
    return max(8, 32 // jnp.dtype(dtype).itemsize)


def _vmem_capacity_bytes():
    try:
        return int(pltpu.get_tpu_info().vmem_capacity_bytes)
    except Exception:
        return 64 * 1024 * 1024  # conservative default (v7x per-TensorCore VMEM)


def _block_bytes(cpg_tile, groups, hw, dtype):
    """Padded VMEM bytes of one (input, output) block pair."""
    itemsize = jnp.dtype(dtype).itemsize
    rows = _round_up(cpg_tile, _sublane(dtype))
    in_b = groups * rows * _round_up(hw, 128) * itemsize
    out_b = rows * _round_up(groups * hw, 128) * itemsize
    return in_b, out_b


def _pick_cpg_tile(cpg, groups, hw, dtype, vmem_capacity, batch):
    """Largest channels-per-group tile whose padded, per-block footprint fits a
    chip-aware budget; prefers >=2 total grid steps (v7x megacore)."""
    sub = _sublane(dtype)
    budget = max(1 << 20, vmem_capacity // 16)

    # Legal tiles: multiples of the sublane count that divide cpg, or full cpg.
    cands = sorted(
        {cpg} | {d for d in range(sub, cpg + 1, sub) if cpg % d == 0},
        reverse=True,
    )
    fitting = [t for t in cands if sum(_block_bytes(t, groups, hw, dtype)) <= budget]
    if not fitting:
        return cands[-1]  # best effort; wrapper raises vmem_limit_bytes to match
    best = fitting[0]
    if batch * (cpg // best) < 2:
        for t in fitting:  # descending -> largest tile still giving >=2 steps
            if batch * (cpg // t) >= 2:
                return t
    return best


def _shuffle_kernel(x_ref, o_ref, *, groups, hw):
    # x_ref: (1, groups, cpg_tile, hw)    -- input viewed as (B, g, C//g, H*W)
    # o_ref: (1, cpg_tile, groups * hw)   -- output viewed as (B, C//g, g*H*W)
    if hw % 128 == 0:
        # Lane-aligned: each group copy is a wide, unmasked lane-block store.
        for j in range(groups):
            o_ref[0, :, j * hw:(j + 1) * hw] = x_ref[0, j, :, :]
    else:
        # H*W not lane-aligned (e.g. 7x7 / 14x14 / 28x28): assemble the
        # lane-folded tile with a lane concatenate, then one dense store.
        o_ref[0] = jnp.concatenate([x_ref[0, j] for j in range(groups)], axis=-1)


def channel_shuffle(x, groups):
    """(B, C, H, W) -> (B, C, H, W):  view(B, g, C//g, H, W) -> transpose(1, 2)
    -> view(B, C, H, W), matching the PyTorch ChannelShuffle forward."""
    b, c, h, w = x.shape
    assert c % groups == 0, "channels must be divisible by groups"
    cpg = c // groups
    hw = h * w
    itemsize = jnp.dtype(x.dtype).itemsize

    capacity = _vmem_capacity_bytes()
    cpg_tile = _pick_cpg_tile(cpg, groups, hw, x.dtype, capacity, b)
    n_c = cpg // cpg_tile

    in_b, out_b = _block_bytes(cpg_tile, groups, hw, x.dtype)
    need = 2 * (in_b + out_b)  # double-buffered input + output blocks
    vmem_limit = int(max(32 << 20, min(capacity * 3 // 4, 2 * need + (8 << 20))))

    # Free relabeling of contiguous memory (no data movement).
    x4 = x.reshape(b, groups, cpg, hw)

    out = pl.pallas_call(
        functools.partial(_shuffle_kernel, groups=groups, hw=hw),
        out_shape=jax.ShapeDtypeStruct((b, cpg, groups * hw), x.dtype),
        grid=(b, n_c),
        in_specs=[
            pl.BlockSpec((1, groups, cpg_tile, hw), lambda bi, ci: (bi, 0, ci, 0))
        ],
        out_specs=pl.BlockSpec(
            (1, cpg_tile, groups * hw), lambda bi, ci: (bi, ci, 0)
        ),
        compiler_params=pltpu.CompilerParams(
            dimension_semantics=("parallel", "parallel"),
            vmem_limit_bytes=vmem_limit,
        ),
        cost_estimate=pl.CostEstimate(
            flops=0, transcendentals=0, bytes_accessed=2 * b * c * hw * itemsize
        ),
    )(x4)

    return out.reshape(b, c, h, w)


def channel_shuffle_ref(x, groups):
    """Pure-JAX reference mirroring the PyTorch forward exactly."""
    b, c, h, w = x.shape
    xr = x.reshape(b, groups, c // groups, h, w)
    xr = jnp.transpose(xr, (0, 2, 1, 3, 4))
    return xr.reshape(b, c, h, w)


if __name__ == "__main__":
    key = jax.random.PRNGKey(0)

    # Primary case: lane-aligned spatial extent (H*W = 256).
    B, C, H, W, G = 2, 8, 16, 16, 4
    x = jax.random.normal(key, (B, C, H, W), dtype=jnp.float32)
    out = jax.block_until_ready(channel_shuffle(x, G))
    ref = channel_shuffle_ref(x, G)
    assert out.shape == ref.shape and out.dtype == ref.dtype
    assert jnp.array_equal(out, ref), "Pallas channel shuffle mismatch (aligned H*W)"

    # ShuffleNet-stage-style case: H*W = 49 (not a multiple of 128) exercises
    # the lane-folded concatenate path.
    x2 = jax.random.normal(jax.random.PRNGKey(1), (1, 12, 7, 7), dtype=jnp.float32)
    out2 = jax.block_until_ready(channel_shuffle(x2, 3))
    ref2 = channel_shuffle_ref(x2, 3)
    assert jnp.array_equal(out2, ref2), "Pallas channel shuffle mismatch (7x7 case)"

    print("KERNEL_OK")
</pallas_src>

<mosaic_0001>
module attributes {stable_mosaic.version = 11 : i64} {
  func.func @_shuffle_kernel(%arg0: i32, %arg1: i32, %arg2: memref<1x4x2x256xf32, #tpu.memory_space<vmem>>, %arg3: memref<1x2x1024xf32, #tpu.memory_space<vmem>>) attributes {dimension_semantics = [#tpu.dimension_semantics<parallel>, #tpu.dimension_semantics<parallel>], iteration_bounds = array<i64: 2, 1>, scalar_prefetch = 0 : i64, scratch_operands = 0 : i64, tpu.core_type = #tpu.core_type<tc>, window_params = [{transform_indices = @transform_0, window_bounds = array<i64: 1, 4, 2, 256>}, {transform_indices = @transform_1, window_bounds = array<i64: 1, 2, 1024>}]} {
    %c0 = arith.constant 0 : index
    %c0_0 = arith.constant 0 : index
    %c0_1 = arith.constant 0 : index
    %c0_2 = arith.constant 0 : index
    %0 = vector.load %arg2[%c0, %c0_0, %c0_1, %c0_2] : memref<1x4x2x256xf32, #tpu.memory_space<vmem>>, vector<1x1x2x256xf32>
    %1 = vector.shape_cast %0 : vector<1x1x2x256xf32> to vector<2x256xf32>
    %c0_3 = arith.constant 0 : index
    %c0_4 = arith.constant 0 : index
    %c0_5 = arith.constant 0 : index
    %2 = vector.load %arg3[%c0_3, %c0_4, %c0_5] : memref<1x2x1024xf32, #tpu.memory_space<vmem>>, vector<1x2x256xf32>
    %3 = vector.shape_cast %2 : vector<1x2x256xf32> to vector<2x256xf32>
    %4 = vector.shape_cast %1 : vector<2x256xf32> to vector<1x2x256xf32>
    tpu.vector_store %arg3[%c0_3, %c0_4, %c0_5], %4 {strides = array<i32>} : memref<1x2x1024xf32, #tpu.memory_space<vmem>>, vector<1x2x256xf32>,
    %c0_6 = arith.constant 0 : index
    %c1 = arith.constant 1 : index
    %c0_7 = arith.constant 0 : index
    %c0_8 = arith.constant 0 : index
    %5 = vector.load %arg2[%c0_6, %c1, %c0_7, %c0_8] : memref<1x4x2x256xf32, #tpu.memory_space<vmem>>, vector<1x1x2x256xf32>
    %6 = vector.shape_cast %5 : vector<1x1x2x256xf32> to vector<2x256xf32>
    %c0_9 = arith.constant 0 : index
    %c0_10 = arith.constant 0 : index
    %c256 = arith.constant 256 : index
    %7 = vector.load %arg3[%c0_9, %c0_10, %c256] : memref<1x2x1024xf32, #tpu.memory_space<vmem>>, vector<1x2x256xf32>
    %8 = vector.shape_cast %7 : vector<1x2x256xf32> to vector<2x256xf32>
    %9 = vector.shape_cast %6 : vector<2x256xf32> to vector<1x2x256xf32>
    tpu.vector_store %arg3[%c0_9, %c0_10, %c256], %9 {strides = array<i32>} : memref<1x2x1024xf32, #tpu.memory_space<vmem>>, vector<1x2x256xf32>,
    %c0_11 = arith.constant 0 : index
    %c2 = arith.constant 2 : index
    %c0_12 = arith.constant 0 : index
    %c0_13 = arith.constant 0 : index
    %10 = vector.load %arg2[%c0_11, %c2, %c0_12, %c0_13] : memref<1x4x2x256xf32, #tpu.memory_space<vmem>>, vector<1x1x2x256xf32>
    %11 = vector.shape_cast %10 : vector<1x1x2x256xf32> to vector<2x256xf32>
    %c0_14 = arith.constant 0 : index
    %c0_15 = arith.constant 0 : index
    %c512 = arith.constant 512 : index
    %12 = vector.load %arg3[%c0_14, %c0_15, %c512] : memref<1x2x1024xf32, #tpu.memory_space<vmem>>, vector<1x2x256xf32>
    %13 = vector.shape_cast %12 : vector<1x2x256xf32> to vector<2x256xf32>
    %14 = vector.shape_cast %11 : vector<2x256xf32> to vector<1x2x256xf32>
    tpu.vector_store %arg3[%c0_14, %c0_15, %c512], %14 {strides = array<i32>} : memref<1x2x1024xf32, #tpu.memory_space<vmem>>, vector<1x2x256xf32>,
    %c0_16 = arith.constant 0 : index
    %c3 = arith.constant 3 : index
    %c0_17 = arith.constant 0 : index
    %c0_18 = arith.constant 0 : index
    %15 = vector.load %arg2[%c0_16, %c3, %c0_17, %c0_18] : memref<1x4x2x256xf32, #tpu.memory_space<vmem>>, vector<1x1x2x256xf32>
    %16 = vector.shape_cast %15 : vector<1x1x2x256xf32> to vector<2x256xf32>
    %c0_19 = arith.constant 0 : index
    %c0_20 = arith.constant 0 : index
    %c768 = arith.constant 768 : index
    %17 = vector.load %arg3[%c0_19, %c0_20, %c768] : memref<1x2x1024xf32, #tpu.memory_space<vmem>>, vector<1x2x256xf32>
    %18 = vector.shape_cast %17 : vector<1x2x256xf32> to vector<2x256xf32>
    %19 = vector.shape_cast %16 : vector<2x256xf32> to vector<1x2x256xf32>
    tpu.vector_store %arg3[%c0_19, %c0_20, %c768], %19 {strides = array<i32>} : memref<1x2x1024xf32, #tpu.memory_space<vmem>>, vector<1x2x256xf32>,
    return
  }
  func.func @transform_0(%arg0: i32, %arg1: i32) -> (i32, i32, i32, i32) {
    %c0_i32 = arith.constant 0 : i32
    %c0_i32_0 = arith.constant 0 : i32
    %c0_i32_1 = arith.constant 0 : i32
    return %arg0, %c0_i32, %arg1, %c0_i32_0 : i32, i32, i32, i32
  }
  func.func @transform_1(%arg0: i32, %arg1: i32) -> (i32, i32, i32) {
    %c0_i32 = arith.constant 0 : i32
    %c0_i32_0 = arith.constant 0 : i32
    return %arg0, %arg1, %c0_i32 : i32, i32, i32
  }
}

</mosaic_0001>

<llo_original>
// kernel: tpu_custom_call.1
$region0: #{tpu_custom_call.1}
  #allocation0 [shape = 'u32[]', space=smem, size = 0x4, offset = 0x4, fixed_abs, tag = 'smem constant byte address 0x4 - core index']
  #allocation1 [shape = 'u32[144,128]{1,0:T(1,128)}', space=vmem, size = 0x12000, scoped, tag = 'internal scratch']
  %s0 = inlined_call_operand.hbm [shape: f32[2,4,2,256], index: 0, kind: input, shape index: {}]
  %s1 = inlined_call_operand.hbm [shape: f32[2,2,1024], index: 1, kind: output, shape index: {}]
  %s2 = sld [smem:[#allocation0]]
  $region41: #{tpu_custom_call.1} parent=0
    _
  %s4 = ssub.s32 1, %s2
  %s5 = scalar_select 0, %s4, %s2
  $region1: #{tpu_custom_call.1} parent=0
    #allocation2 [shape = 'u8[16384]{0}', space=vmem, size = 0x4000, scoped, tag = 'input window, operand 0']
    #allocation3 [shape = 's32[2]{0}', space=sflag, size = 0x8, scoped, tag = 'scoped memory for tpu_custom_call.1']
    #allocation4 [shape = 's32[2]{0}', space=sflag, size = 0x8, scoped, tag = 'scoped memory for tpu_custom_call.1']
    #allocation5 [shape = 'u8[16384]{0}', space=vmem, size = 0x4000, scoped, tag = 'output window, operand 0']
    %6 = vsyncpa [#allocation3], 0
    %s7 = scalar_lea.sflag [#allocation3], 1
    %8 = vsyncpa %s7, 0
    %9 = vsyncpa [#allocation4], 0
    %s10 = scalar_lea.sflag [#allocation4], 1
    %11 = vsyncpa %s10, 0
    loop: start=0, step=1, limit=4
    $region2: #{tpu_custom_call.1} parent=1 // loop_pre_header
      _
    $region3: #{tpu_custom_call.1} parent=1 // loop_header
      %s13 = sphi 0, %s17
      %p14 = scmp.ge.s32.totalorder %s13, 4
      %s20 = sphi 0, %s32
      %s21 = sphi 0, %s28
      %s22 = sphi 0, %s20
      %s23 = sphi 0, %s21
      %s24 = sphi 0, %s22
      %s25 = sphi 0, %s23
      %s37 = sphi 0, %s39
      %s40 = sphi 0, %s37
      %s41 = sphi 0, %s40
      %s57 = sphi 0, %s41
      %s65 = sphi 0, %s67
      %s68 = sphi 0, %s65
      %s69 = sphi 0, %s68
      %s85 = sphi 0, %s69
    $region4: #{tpu_custom_call.1} parent=1 // loop_header_branch
      %16 = sbr.rel (%p14) target = $region8
    $region5: #{tpu_custom_call.1} parent=1 // loop_body
      %s18 = ssub.s32 %s13, 1
      %s19 = ssub.s32 %s13, 2
      %s26 = sadd.s32 1, %s21
      %p27 = scmp.ge.s32.totalorder %s26, 1
      %s28 = scalar_select %p27, 0, %s26
      %s29 = sadd.s32 1, %s20
      %s30 = scalar_select %p27, %s29, %s20
      %p31 = scmp.ge.s32.totalorder %s30, 2
      %s32 = scalar_select %p31, 0, %s30
      %s33 = ssub.s32 %s20, %s32
      %s34 = ssub.s32 %s21, %s28
      %s35 = sor.u32 %s33, %s34
      %p36 = scmp.eq.s32.totalorder %s35, 0
      %s38 = sadd.s32 %s37, 1
      %s39 = scalar_select %p36, %s37, %s38
      %p42 = pneg %p36
      %p43 = scmp.eq.s32.totalorder %s13, 1
      %p44 = por %p42, %p43
      %p45 = scmp.ne.s32.totalorder %s37, %s40
      %p46 = scmp.eq.s32.totalorder %s13, 0
      %p47 = por %p45, %p46
      %p48 = scmp.ne.s32.totalorder %s37, %s40
      %p49 = scmp.eq.s32.totalorder %s18, 1
      %p50 = por %p48, %p49
      %p51 = scmp.ne.s32.totalorder %s40, %s41
      %p52 = scmp.eq.s32.totalorder %s18, 0
      %p53 = por %p51, %p52
      %p54 = scmp.ne.s32.totalorder %s40, %s41
      %p55 = scmp.eq.s32.totalorder %s19, 1
      %p56 = por %p54, %p55
      %p58 = scmp.ne.s32.totalorder %s41, %s57
      %p59 = scmp.eq.s32.totalorder %s19, 0
      %p60 = por %p58, %p59
      %s61 = ssub.s32 %s20, %s32
      %s62 = ssub.s32 %s21, %s28
      %s63 = sor.u32 %s61, %s62
      %p64 = scmp.eq.s32.totalorder %s63, 0
      %s66 = sadd.s32 %s65, 1
      %s67 = scalar_select %p64, %s65, %s66
      %p70 = pneg %p64
      %p71 = scmp.eq.s32.totalorder %s13, 1
      %p72 = por %p70, %p71
      %p73 = scmp.ne.s32.totalorder %s65, %s68
      %p74 = scmp.eq.s32.totalorder %s13, 0
      %p75 = por %p73, %p74
      %p76 = scmp.ne.s32.totalorder %s65, %s68
      %p77 = scmp.eq.s32.totalorder %s18, 1
      %p78 = por %p76, %p77
      %p79 = scmp.ne.s32.totalorder %s68, %s69
      %p80 = scmp.eq.s32.totalorder %s18, 0
      %p81 = por %p79, %p80
      %p82 = scmp.ne.s32.totalorder %s68, %s69
      %p83 = scmp.eq.s32.totalorder %s19, 1
      %p84 = por %p82, %p83
      %p86 = scmp.ne.s32.totalorder %s69, %s85
      %p87 = scmp.eq.s32.totalorder %s19, 0
      %p88 = por %p86, %p87
      %p89 = scmp.le.s32.totalorder 1, %s13
      %p90 = scmp.lt.s32.totalorder %s13, 3
      %p91 = pnand %p89, %p90
      %p92 = pneg %p91
      // Predicated region
      $region9: #{tpu_custom_call.1} parent=5 // pred_check
        _
      $region10: #{tpu_custom_call.1} parent=5 // pred_check_branch
        %94 = sbr.rel (%p91) target = $region12
      $region11: #{tpu_custom_call.1} parent=5 // pred_region
        %s95 = ssub.s32 %s13, 1
      $region12: #{tpu_custom_call.1} parent=5 // pred_fallthru
        _
      %p96 = scmp.lt.s32.totalorder %s13, 2
      // Predicated region
      $region13: #{tpu_custom_call.1} parent=5 // pred_check
        %p97 = pneg %p96
      $region14: #{tpu_custom_call.1} parent=5 // pred_check_branch
        %99 = sbr.rel (%p97) target = $region16
      $region15: #{tpu_custom_call.1} parent=5 // pred_region
        // Predicated region
        $region17: #{tpu_custom_call.1} parent=15 // pred_check
          %p100 = pneg %p47
        $region18: #{tpu_custom_call.1} parent=15 // pred_check_branch
          %102 = sbr.rel (%p100) target = $region20
        $region19: #{tpu_custom_call.1} parent=15 // pred_region
          %s103 = sand.u32 %s37, 1
          %s104 = scalar_lea.sflag [#allocation3], %s103
          %s105 = sand.u32 %s37, 1
          %s106 = smul.addr %s105, 16
          %s107 = scalar_lea.vmem [#allocation2], %s106
          %s109 = ssub.s32 256, 256
          %110 = vsyncadd %s104, %s109
          %s111 = smul.addr %s21, 2
          %s112 = smul.addr %s20, 8
          %s113 = sadd.s32 %s111, %s112
          %s114 = smul.addr %s113, 32
          %s115 = scalar_lea.hbm %s0, %s114
          %s116 = sshll.u32 %s107, 4
          %s117 = int_to_ptr.vmem [resolvable:$true] %s116
          %122 = dma.hbm_to_vmem [thread:$0]  %s115, 256, %s117, %s104, 64, 64, 4
        $region20: #{tpu_custom_call.1} parent=15 // pred_fallthru
          _
      $region16: #{tpu_custom_call.1} parent=5 // pred_fallthru
        _
      %p123 = scmp.le.s32.totalorder 1, %s13
      %p124 = scmp.lt.s32.totalorder %s13, 3
      %p125 = pnand %p123, %p124
      %p126 = pneg %p125
      // Predicated region
      $region21: #{tpu_custom_call.1} parent=5 // pred_check
        _
      $region22: #{tpu_custom_call.1} parent=5 // pred_check_branch
        %128 = sbr.rel (%p125) target = $region24
      $region23: #{tpu_custom_call.1} parent=5 // pred_region
        %s129 = ssub.s32 %s13, 1
        %s130 = sand.u32 %s40, 1
        %s131 = scalar_lea.sflag [#allocation3], %s130
        %s132 = sand.u32 %s40, 1
        %s133 = smul.addr %s132, 16
        %s134 = scalar_lea.vmem [#allocation2], %s133
        // Predicated region
        $region25: #{tpu_custom_call.1} parent=23 // pred_check
          %p135 = pneg %p53
        $region26: #{tpu_custom_call.1} parent=23 // pred_check_branch
          %137 = sbr.rel (%p135) target = $region28
        $region27: #{tpu_custom_call.1} parent=23 // pred_region
          %138 = dma.done %s131, 256
        $region28: #{tpu_custom_call.1} parent=23 // pred_fallthru
          _
        %s139 = sand.u32 %s40, 1
        %s140 = scalar_lea.sflag [#allocation3], %s139
        %s141 = sand.u32 %s40, 1
        %s142 = smul.addr %s141, 16
        %s143 = scalar_lea.vmem [#allocation2], %s142
        %p144 = pneg %p53
        %p145 = pneg %p50
        %p146 = pneg %p81
        %p147 = pneg %p78
        %s148 = sand.u32 %s68, 1
        %s149 = scalar_lea.sflag [#allocation4], %s148
        %s150 = sand.u32 %s68, 1
        %s151 = smul.addr %s150, 16
        %s152 = scalar_lea.vmem [#allocation5], %s151
        %v153 = vld [vmem:[%s134] sm:$0xf]
        %154 = vst [vmem:[%s152] sm:$0xf] %v153
        %s155 = scalar_lea.vmem %s134, 4 [#allocation2]
        %v156 = vld [vmem:[%s155] sm:$0xf]
        %157 = vst [vmem:[%s152 + $0x4] sm:$0xf] %v156
        %s158 = scalar_lea.vmem %s134, 8 [#allocation2]
        %v159 = vld [vmem:[%s158] sm:$0xf]
        %160 = vst [vmem:[%s152 + $0x8] sm:$0xf] %v159
        %s161 = scalar_lea.vmem %s134, 12 [#allocation2]
        %v162 = vld [vmem:[%s161] sm:$0xf]
        %163 = vst [vmem:[%s152 + $0xc] sm:$0xf] %v162
        %s164 = sand.u32 %s68, 1
        %s165 = scalar_lea.sflag [#allocation4], %s164
        %s166 = sand.u32 %s68, 1
        %s167 = smul.addr %s166, 16
        %s168 = scalar_lea.vmem [#allocation5], %s167
        // Predicated region
        $region29: #{tpu_custom_call.1} parent=23 // pred_check
          %p169 = pneg %p78
        $region30: #{tpu_custom_call.1} parent=23 // pred_check_branch
          %171 = sbr.rel (%p169) target = $region32
        $region31: #{tpu_custom_call.1} parent=23 // pred_region
          %s173 = ssub.s32 256, 256
          %174 = vsyncadd %s165, %s173
          %s175 = smul.addr %s23, 8
          %s176 = smul.addr %s22, 8
          %s177 = sadd.s32 %s175, %s176
          %s178 = smul.addr %s177, 32
          %s179 = scalar_lea.hbm %s1, %s178
          %s181 = sshll.u32 %s168, 4
          %s182 = int_to_ptr.vmem [resolvable:$true] %s181
          %184 = dma.vmem_to_hbm [thread:$0]  %s182, 256, %s179, %s165
        $region32: #{tpu_custom_call.1} parent=23 // pred_fallthru
          _
      $region24: #{tpu_custom_call.1} parent=5 // pred_fallthru
        _
      %p185 = scmp.le.s32.totalorder 2, %s13
      // Predicated region
      $region33: #{tpu_custom_call.1} parent=5 // pred_check
        %p186 = pneg %p185
      $region34: #{tpu_custom_call.1} parent=5 // pred_check_branch
        %188 = sbr.rel (%p186) target = $region36
      $region35: #{tpu_custom_call.1} parent=5 // pred_region
        %s189 = ssub.s32 %s13, 2
        // Predicated region
        $region37: #{tpu_custom_call.1} parent=35 // pred_check
          %p190 = pneg %p84
        $region38: #{tpu_custom_call.1} parent=35 // pred_check_branch
          %192 = sbr.rel (%p190) target = $region40
        $region39: #{tpu_custom_call.1} parent=35 // pred_region
          %s193 = sand.u32 %s69, 1
          %s194 = scalar_lea.sflag [#allocation4], %s193
          %s195 = sand.u32 %s69, 1
          %s196 = smul.addr %s195, 16
          %s197 = scalar_lea.vmem [#allocation5], %s196
          %198 = dma.done %s194, 256
        $region40: #{tpu_custom_call.1} parent=35 // pred_fallthru
          _
      $region36: #{tpu_custom_call.1} parent=5 // pred_fallthru
        _
    $region6: #{tpu_custom_call.1} parent=1 // loop_footer
      %s17 = sadd.s32 1, %s13
    $region7: #{tpu_custom_call.1} parent=1 // loop_footer_branch
      %12 = sbr.rel target = $region3
    $region8: #{tpu_custom_call.1} parent=1 // loop_exit
      _
    %199 = vsyncpa [#allocation3], 1
    %s200 = scalar_lea.sflag [#allocation3], 1
    %201 = vsyncpa %s200, 1
    %202 = vsyncpa [#allocation4], 1
    %s203 = scalar_lea.sflag [#allocation4], 1
    %204 = vsyncpa %s203, 1

</llo_original>
